<compile_context>
chip_gen: v5e
topology: v5e:2x2
jax: 0.10.0
libtpu: 0.0.40
codegen_flags: <defaults>
</compile_context>

<pallas_src>
import jax
import jax.numpy as jnp
from jax.experimental import pallas as pl
from jax.experimental.pallas import tpu as pltpu


def _mlp3_vpu_kernel(x_ref, w_ref, b_ref, o_ref):
    """Three chained Linear(3,3) layers computed entirely on the VPU.

    x_ref : (TB, 3) VMEM tile of the input batch.
    w_ref : (27,)   SMEM; 3 layers x PyTorch [out, in] 3x3 weights, row-major.
    b_ref : (9,)    SMEM; 3 layers x 3 biases.
    o_ref : (TB, 3) VMEM output tile.
    """
    x = x_ref[...].astype(jnp.float32)
    # Keep activations as three (TB, 1) columns; feature dim is only 3, so
    # everything stays inside a single lane group (no MXU, no XLU reductions).
    cols = (x[:, 0:1], x[:, 1:2], x[:, 2:3])

    for l in range(3):          # layer (static unroll)
        new_cols = []
        for j in range(3):      # output feature (static unroll)
            # h_j = sum_i x_i * W[l, j, i] + b[l, j]  (scalar-broadcast FMAs)
            y = cols[0] * w_ref[l * 9 + j * 3 + 0]
            y = y + cols[1] * w_ref[l * 9 + j * 3 + 1]
            y = y + cols[2] * w_ref[l * 9 + j * 3 + 2]
            y = y + b_ref[l * 3 + j]
            new_cols.append(y)
        cols = tuple(new_cols)

    o_ref[...] = jnp.concatenate(cols, axis=1).astype(o_ref.dtype)


def _pick_batch_tile(batch):
    """Sublane-aligned batch tile; single full-array block for small batches."""
    if batch <= 1024:
        return batch
    for cand in (1024, 512, 256):
        if batch % cand == 0:
            return cand
    return batch  # ragged large batch: fall back to one full-array block


def simple_module_forward(x, params):
    """params = (w1, b1, w2, b2, w3, b3); w_i: (3,3) [out,in], b_i: (3,)."""
    w1, b1, w2, b2, w3, b3 = params
    batch, feat = x.shape
    assert feat == 3, "SimpleModuleWithCheckpointing uses Linear(3, 3)"

    # Pack all parameters into two tiny SMEM-bound arrays (2 DMAs, not 6).
    w_packed = jnp.stack([w1, w2, w3]).astype(jnp.float32).reshape(-1)  # (27,)
    b_packed = jnp.stack([b1, b2, b3]).astype(jnp.float32).reshape(-1)  # (9,)

    tb = _pick_batch_tile(batch)
    grid = (batch // tb,)

    out = pl.pallas_call(
        _mlp3_vpu_kernel,
        out_shape=jax.ShapeDtypeStruct((batch, feat), x.dtype),
        grid=grid,
        in_specs=[
            pl.BlockSpec((tb, feat), lambda i: (i, 0)),           # x tile (VMEM)
            pl.BlockSpec(memory_space=pltpu.MemorySpace.SMEM),    # packed weights
            pl.BlockSpec(memory_space=pltpu.MemorySpace.SMEM),    # packed biases
        ],
        out_specs=pl.BlockSpec((tb, feat), lambda i: (i, 0)),
        compiler_params=pltpu.CompilerParams(
            dimension_semantics=("parallel",),  # batch axis: shard across TCs (v7x)
        ),
    )(x, w_packed, b_packed)
    return out


def _init_linear_params(key, in_features, out_features):
    """Deterministic init mimicking nn.Linear's uniform(-1/sqrt(in), 1/sqrt(in))."""
    kw, kb = jax.random.split(key)
    bound = 1.0 / (in_features ** 0.5)
    w = jax.random.uniform(kw, (out_features, in_features), jnp.float32,
                           minval=-bound, maxval=bound)
    b = jax.random.uniform(kb, (out_features,), jnp.float32,
                           minval=-bound, maxval=bound)
    return w, b


def _reference_forward(x, params):
    w1, b1, w2, b2, w3, b3 = params
    h = x @ w1.T + b1
    h = h @ w2.T + b2
    return h @ w3.T + b3


if __name__ == "__main__":
    key = jax.random.PRNGKey(0)
    k_x, k1, k2, k3 = jax.random.split(key, 4)

    # Small batch of feature-dim-3 inputs (the module implies in_features=3).
    batch = 8
    x = jax.random.normal(k_x, (batch, 3), jnp.float32)

    w1, b1 = _init_linear_params(k1, 3, 3)
    w2, b2 = _init_linear_params(k2, 3, 3)
    w3, b3 = _init_linear_params(k3, 3, 3)
    params = (w1, b1, w2, b2, w3, b3)

    out = simple_module_forward(x, params)
    out = jax.block_until_ready(out)

    ref = _reference_forward(x, params)
    assert out.shape == (batch, 3)
    assert jnp.allclose(out, ref, atol=1e-5, rtol=1e-5), "mismatch vs reference"

    print("KERNEL_OK")
</pallas_src>

<mosaic_0001>
module attributes {stable_mosaic.version = 11 : i64} {
  func.func @_mlp3_vpu_kernel(%arg0: i32, %arg1: memref<8x3xf32, #tpu.memory_space<vmem>>, %arg2: memref<27xf32, #tpu.memory_space<smem>>, %arg3: memref<9xf32, #tpu.memory_space<smem>>, %arg4: memref<8x3xf32, #tpu.memory_space<vmem>>) attributes {dimension_semantics = [#tpu.dimension_semantics<parallel>], iteration_bounds = array<i64: 1>, scalar_prefetch = 0 : i64, scratch_operands = 0 : i64, tpu.core_type = #tpu.core_type<tc>, window_params = [{transform_indices = @transform_0, window_bounds = array<i64: 8, 3>}, {transform_indices = @transform_1, window_bounds = array<i64: 27>}, {transform_indices = @transform_2, window_bounds = array<i64: 9>}, {transform_indices = @transform_3, window_bounds = array<i64: 8, 3>}]} {
    %c0 = arith.constant 0 : index
    %c0_0 = arith.constant 0 : index
    %0 = vector.load %arg1[%c0, %c0_0] : memref<8x3xf32, #tpu.memory_space<vmem>>, vector<8x3xf32>
    %1 = vector.extract_strided_slice %0 {offsets = [0, 0], sizes = [8, 1], strides = [1, 1]} : vector<8x3xf32> to vector<8x1xf32>
    %2 = vector.extract_strided_slice %0 {offsets = [0, 1], sizes = [8, 1], strides = [1, 1]} : vector<8x3xf32> to vector<8x1xf32>
    %3 = vector.extract_strided_slice %0 {offsets = [0, 2], sizes = [8, 1], strides = [1, 1]} : vector<8x3xf32> to vector<8x1xf32>
    %c0_1 = arith.constant 0 : index
    %4 = memref.load %arg2[%c0_1] : memref<27xf32, #tpu.memory_space<smem>>
    %5 = vector.broadcast %4 : f32 to vector<8x1xf32>
    %6 = arith.mulf %1, %5 : vector<8x1xf32>
    %c1 = arith.constant 1 : index
    %7 = memref.load %arg2[%c1] : memref<27xf32, #tpu.memory_space<smem>>
    %8 = vector.broadcast %7 : f32 to vector<8x1xf32>
    %9 = arith.mulf %2, %8 : vector<8x1xf32>
    %10 = arith.addf %6, %9 : vector<8x1xf32>
    %c2 = arith.constant 2 : index
    %11 = memref.load %arg2[%c2] : memref<27xf32, #tpu.memory_space<smem>>
    %12 = vector.broadcast %11 : f32 to vector<8x1xf32>
    %13 = arith.mulf %3, %12 : vector<8x1xf32>
    %14 = arith.addf %10, %13 : vector<8x1xf32>
    %c0_2 = arith.constant 0 : index
    %15 = memref.load %arg3[%c0_2] : memref<9xf32, #tpu.memory_space<smem>>
    %16 = vector.broadcast %15 : f32 to vector<8x1xf32>
    %17 = arith.addf %14, %16 : vector<8x1xf32>
    %c3 = arith.constant 3 : index
    %18 = memref.load %arg2[%c3] : memref<27xf32, #tpu.memory_space<smem>>
    %19 = vector.broadcast %18 : f32 to vector<8x1xf32>
    %20 = arith.mulf %1, %19 : vector<8x1xf32>
    %c4 = arith.constant 4 : index
    %21 = memref.load %arg2[%c4] : memref<27xf32, #tpu.memory_space<smem>>
    %22 = vector.broadcast %21 : f32 to vector<8x1xf32>
    %23 = arith.mulf %2, %22 : vector<8x1xf32>
    %24 = arith.addf %20, %23 : vector<8x1xf32>
    %c5 = arith.constant 5 : index
    %25 = memref.load %arg2[%c5] : memref<27xf32, #tpu.memory_space<smem>>
    %26 = vector.broadcast %25 : f32 to vector<8x1xf32>
    %27 = arith.mulf %3, %26 : vector<8x1xf32>
    %28 = arith.addf %24, %27 : vector<8x1xf32>
    %c1_3 = arith.constant 1 : index
    %29 = memref.load %arg3[%c1_3] : memref<9xf32, #tpu.memory_space<smem>>
    %30 = vector.broadcast %29 : f32 to vector<8x1xf32>
    %31 = arith.addf %28, %30 : vector<8x1xf32>
    %c6 = arith.constant 6 : index
    %32 = memref.load %arg2[%c6] : memref<27xf32, #tpu.memory_space<smem>>
    %33 = vector.broadcast %32 : f32 to vector<8x1xf32>
    %34 = arith.mulf %1, %33 : vector<8x1xf32>
    %c7 = arith.constant 7 : index
    %35 = memref.load %arg2[%c7] : memref<27xf32, #tpu.memory_space<smem>>
    %36 = vector.broadcast %35 : f32 to vector<8x1xf32>
    %37 = arith.mulf %2, %36 : vector<8x1xf32>
    %38 = arith.addf %34, %37 : vector<8x1xf32>
    %c8 = arith.constant 8 : index
    %39 = memref.load %arg2[%c8] : memref<27xf32, #tpu.memory_space<smem>>
    %40 = vector.broadcast %39 : f32 to vector<8x1xf32>
    %41 = arith.mulf %3, %40 : vector<8x1xf32>
    %42 = arith.addf %38, %41 : vector<8x1xf32>
    %c2_4 = arith.constant 2 : index
    %43 = memref.load %arg3[%c2_4] : memref<9xf32, #tpu.memory_space<smem>>
    %44 = vector.broadcast %43 : f32 to vector<8x1xf32>
    %45 = arith.addf %42, %44 : vector<8x1xf32>
    %c9 = arith.constant 9 : index
    %46 = memref.load %arg2[%c9] : memref<27xf32, #tpu.memory_space<smem>>
    %47 = vector.broadcast %46 : f32 to vector<8x1xf32>
    %48 = arith.mulf %17, %47 : vector<8x1xf32>
    %c10 = arith.constant 10 : index
    %49 = memref.load %arg2[%c10] : memref<27xf32, #tpu.memory_space<smem>>
    %50 = vector.broadcast %49 : f32 to vector<8x1xf32>
    %51 = arith.mulf %31, %50 : vector<8x1xf32>
    %52 = arith.addf %48, %51 : vector<8x1xf32>
    %c11 = arith.constant 11 : index
    %53 = memref.load %arg2[%c11] : memref<27xf32, #tpu.memory_space<smem>>
    %54 = vector.broadcast %53 : f32 to vector<8x1xf32>
    %55 = arith.mulf %45, %54 : vector<8x1xf32>
    %56 = arith.addf %52, %55 : vector<8x1xf32>
    %c3_5 = arith.constant 3 : index
    %57 = memref.load %arg3[%c3_5] : memref<9xf32, #tpu.memory_space<smem>>
    %58 = vector.broadcast %57 : f32 to vector<8x1xf32>
    %59 = arith.addf %56, %58 : vector<8x1xf32>
    %c12 = arith.constant 12 : index
    %60 = memref.load %arg2[%c12] : memref<27xf32, #tpu.memory_space<smem>>
    %61 = vector.broadcast %60 : f32 to vector<8x1xf32>
    %62 = arith.mulf %17, %61 : vector<8x1xf32>
    %c13 = arith.constant 13 : index
    %63 = memref.load %arg2[%c13] : memref<27xf32, #tpu.memory_space<smem>>
    %64 = vector.broadcast %63 : f32 to vector<8x1xf32>
    %65 = arith.mulf %31, %64 : vector<8x1xf32>
    %66 = arith.addf %62, %65 : vector<8x1xf32>
    %c14 = arith.constant 14 : index
    %67 = memref.load %arg2[%c14] : memref<27xf32, #tpu.memory_space<smem>>
    %68 = vector.broadcast %67 : f32 to vector<8x1xf32>
    %69 = arith.mulf %45, %68 : vector<8x1xf32>
    %70 = arith.addf %66, %69 : vector<8x1xf32>
    %c4_6 = arith.constant 4 : index
    %71 = memref.load %arg3[%c4_6] : memref<9xf32, #tpu.memory_space<smem>>
    %72 = vector.broadcast %71 : f32 to vector<8x1xf32>
    %73 = arith.addf %70, %72 : vector<8x1xf32>
    %c15 = arith.constant 15 : index
    %74 = memref.load %arg2[%c15] : memref<27xf32, #tpu.memory_space<smem>>
    %75 = vector.broadcast %74 : f32 to vector<8x1xf32>
    %76 = arith.mulf %17, %75 : vector<8x1xf32>
    %c16 = arith.constant 16 : index
    %77 = memref.load %arg2[%c16] : memref<27xf32, #tpu.memory_space<smem>>
    %78 = vector.broadcast %77 : f32 to vector<8x1xf32>
    %79 = arith.mulf %31, %78 : vector<8x1xf32>
    %80 = arith.addf %76, %79 : vector<8x1xf32>
    %c17 = arith.constant 17 : index
    %81 = memref.load %arg2[%c17] : memref<27xf32, #tpu.memory_space<smem>>
    %82 = vector.broadcast %81 : f32 to vector<8x1xf32>
    %83 = arith.mulf %45, %82 : vector<8x1xf32>
    %84 = arith.addf %80, %83 : vector<8x1xf32>
    %c5_7 = arith.constant 5 : index
    %85 = memref.load %arg3[%c5_7] : memref<9xf32, #tpu.memory_space<smem>>
    %86 = vector.broadcast %85 : f32 to vector<8x1xf32>
    %87 = arith.addf %84, %86 : vector<8x1xf32>
    %c18 = arith.constant 18 : index
    %88 = memref.load %arg2[%c18] : memref<27xf32, #tpu.memory_space<smem>>
    %89 = vector.broadcast %88 : f32 to vector<8x1xf32>
    %90 = arith.mulf %59, %89 : vector<8x1xf32>
    %c19 = arith.constant 19 : index
    %91 = memref.load %arg2[%c19] : memref<27xf32, #tpu.memory_space<smem>>
    %92 = vector.broadcast %91 : f32 to vector<8x1xf32>
    %93 = arith.mulf %73, %92 : vector<8x1xf32>
    %94 = arith.addf %90, %93 : vector<8x1xf32>
    %c20 = arith.constant 20 : index
    %95 = memref.load %arg2[%c20] : memref<27xf32, #tpu.memory_space<smem>>
    %96 = vector.broadcast %95 : f32 to vector<8x1xf32>
    %97 = arith.mulf %87, %96 : vector<8x1xf32>
    %98 = arith.addf %94, %97 : vector<8x1xf32>
    %c6_8 = arith.constant 6 : index
    %99 = memref.load %arg3[%c6_8] : memref<9xf32, #tpu.memory_space<smem>>
    %100 = vector.broadcast %99 : f32 to vector<8x1xf32>
    %101 = arith.addf %98, %100 : vector<8x1xf32>
    %c21 = arith.constant 21 : index
    %102 = memref.load %arg2[%c21] : memref<27xf32, #tpu.memory_space<smem>>
    %103 = vector.broadcast %102 : f32 to vector<8x1xf32>
    %104 = arith.mulf %59, %103 : vector<8x1xf32>
    %c22 = arith.constant 22 : index
    %105 = memref.load %arg2[%c22] : memref<27xf32, #tpu.memory_space<smem>>
    %106 = vector.broadcast %105 : f32 to vector<8x1xf32>
    %107 = arith.mulf %73, %106 : vector<8x1xf32>
    %108 = arith.addf %104, %107 : vector<8x1xf32>
    %c23 = arith.constant 23 : index
    %109 = memref.load %arg2[%c23] : memref<27xf32, #tpu.memory_space<smem>>
    %110 = vector.broadcast %109 : f32 to vector<8x1xf32>
    %111 = arith.mulf %87, %110 : vector<8x1xf32>
    %112 = arith.addf %108, %111 : vector<8x1xf32>
    %c7_9 = arith.constant 7 : index
    %113 = memref.load %arg3[%c7_9] : memref<9xf32, #tpu.memory_space<smem>>
    %114 = vector.broadcast %113 : f32 to vector<8x1xf32>
    %115 = arith.addf %112, %114 : vector<8x1xf32>
    %c24 = arith.constant 24 : index
    %116 = memref.load %arg2[%c24] : memref<27xf32, #tpu.memory_space<smem>>
    %117 = vector.broadcast %116 : f32 to vector<8x1xf32>
    %118 = arith.mulf %59, %117 : vector<8x1xf32>
    %c25 = arith.constant 25 : index
    %119 = memref.load %arg2[%c25] : memref<27xf32, #tpu.memory_space<smem>>
    %120 = vector.broadcast %119 : f32 to vector<8x1xf32>
    %121 = arith.mulf %73, %120 : vector<8x1xf32>
    %122 = arith.addf %118, %121 : vector<8x1xf32>
    %c26 = arith.constant 26 : index
    %123 = memref.load %arg2[%c26] : memref<27xf32, #tpu.memory_space<smem>>
    %124 = vector.broadcast %123 : f32 to vector<8x1xf32>
    %125 = arith.mulf %87, %124 : vector<8x1xf32>
    %126 = arith.addf %122, %125 : vector<8x1xf32>
    %c8_10 = arith.constant 8 : index
    %127 = memref.load %arg3[%c8_10] : memref<9xf32, #tpu.memory_space<smem>>
    %128 = vector.broadcast %127 : f32 to vector<8x1xf32>
    %129 = arith.addf %126, %128 : vector<8x1xf32>
    %130 = tpu.concatenate %101, %115, %129 in 1 : vector<8x1xf32>, vector<8x1xf32>, vector<8x1xf32> -> vector<8x3xf32>
    %c0_11 = arith.constant 0 : index
    %c0_12 = arith.constant 0 : index
    %131 = vector.load %arg4[%c0_11, %c0_12] : memref<8x3xf32, #tpu.memory_space<vmem>>, vector<8x3xf32>
    tpu.vector_store %arg4[%c0_11, %c0_12], %130 {strides = array<i32>} : memref<8x3xf32, #tpu.memory_space<vmem>>, vector<8x3xf32>,
    return
  }
  func.func @transform_0(%arg0: i32) -> (i32, i32) {
    %c0_i32 = arith.constant 0 : i32
    %c0_i32_0 = arith.constant 0 : i32
    return %arg0, %c0_i32 : i32, i32
  }
  func.func @transform_1(%arg0: i32) -> i32 {
    %c0_i32 = arith.constant 0 : i32
    %c0_i32_0 = arith.constant 0 : i32
    return %c0_i32 : i32
  }
  func.func @transform_2(%arg0: i32) -> i32 {
    %c0_i32 = arith.constant 0 : i32
    %c0_i32_0 = arith.constant 0 : i32
    return %c0_i32 : i32
  }
  func.func @transform_3(%arg0: i32) -> (i32, i32) {
    %c0_i32 = arith.constant 0 : i32
    %c0_i32_0 = arith.constant 0 : i32
    return %arg0, %c0_i32 : i32, i32
  }
}

</mosaic_0001>

<llo_original>
// kernel: tpu_custom_call.1
$region0: #{tpu_custom_call.1}
  #allocation0 [shape = 'u32[]', space=smem, size = 0x4, offset = 0x4, fixed_abs, tag = 'smem constant byte address 0x4 - core index']
  #allocation1 [shape = 'u32[72,128]{1,0:T(1,128)}', space=vmem, size = 0x9000, scoped, tag = 'internal scratch']
  %s0 = inlined_call_operand.vmem [shape: f32[8,3], index: 0, kind: input, shape index: {}]
  %s1 = inlined_call_operand.vmem [shape: f32[27], index: 1, kind: input, shape index: {}]
  %s2 = inlined_call_operand.vmem [shape: f32[9], index: 2, kind: input, shape index: {}]
  %s3 = inlined_call_operand.vmem [shape: f32[8,3], index: 3, kind: output, shape index: {}]
  %s4 = sld [smem:[#allocation0]]
  $region30: #{tpu_custom_call.1} parent=0
    _
  %s6 = ssub.s32 1, %s4
  %s7 = scalar_select 0, %s6, %s4
  $region1: #{tpu_custom_call.1} parent=0
    #allocation2 [shape = 'u8[512]{0}', space=smem, size = 0x200, scoped, tag = 'input window, operand 1, single buffered']
    #allocation3 [shape = 's32[1]{0}', space=sflag, size = 0x4, scoped, tag = 'scoped memory for tpu_custom_call.1']
    #allocation4 [shape = 'u8[512]{0}', space=smem, size = 0x200, scoped, tag = 'input window, operand 2, single buffered']
    #allocation5 [shape = 's32[1]{0}', space=sflag, size = 0x4, scoped, tag = 'scoped memory for tpu_custom_call.1']
    %8 = vsyncpa [#allocation3], 0
    %9 = vsyncpa [#allocation5], 0
    // Predicated region
    $region2: #{tpu_custom_call.1} parent=1 // pred_check
      _
    $region3: #{tpu_custom_call.1} parent=1 // pred_check_branch
      %11 = sbr.rel (0) target = $region5
    $region4: #{tpu_custom_call.1} parent=1 // pred_region
      _
    $region5: #{tpu_custom_call.1} parent=1 // pred_fallthru
      _
    // Predicated region
    $region6: #{tpu_custom_call.1} parent=1 // pred_check
      _
    $region7: #{tpu_custom_call.1} parent=1 // pred_check_branch
      %13 = sbr.rel (0) target = $region9
    $region8: #{tpu_custom_call.1} parent=1 // pred_region
      %15 = vsyncadd [#allocation3], 0
      %s17 = sshll.u32 %s1, 4
      %s18 = int_to_ptr.vmem [resolvable:$true] %s17
      %20 = dma.vmem_to_smem %s18, 16, [#allocation2], [#allocation3]
    $region9: #{tpu_custom_call.1} parent=1 // pred_fallthru
      _
    // Predicated region
    $region10: #{tpu_custom_call.1} parent=1 // pred_check
      _
    $region11: #{tpu_custom_call.1} parent=1 // pred_check_branch
      %22 = sbr.rel (0) target = $region13
    $region12: #{tpu_custom_call.1} parent=1 // pred_region
      %24 = vsyncadd [#allocation5], 0
      %s26 = sshll.u32 %s2, 4
      %s27 = int_to_ptr.vmem [resolvable:$true] %s26
      %29 = dma.vmem_to_smem %s27, 16, [#allocation4], [#allocation5]
    $region13: #{tpu_custom_call.1} parent=1 // pred_fallthru
      _
    // Predicated region
    $region14: #{tpu_custom_call.1} parent=1 // pred_check
      _
    $region15: #{tpu_custom_call.1} parent=1 // pred_check_branch
      %31 = sbr.rel (0) target = $region17
    $region16: #{tpu_custom_call.1} parent=1 // pred_region
      %33 = dma.done [#allocation3], 16
    $region17: #{tpu_custom_call.1} parent=1 // pred_fallthru
      _
    // Predicated region
    $region18: #{tpu_custom_call.1} parent=1 // pred_check
      _
    $region19: #{tpu_custom_call.1} parent=1 // pred_check_branch
      %35 = sbr.rel (0) target = $region21
    $region20: #{tpu_custom_call.1} parent=1 // pred_region
      %37 = dma.done [#allocation5], 16
    $region21: #{tpu_custom_call.1} parent=1 // pred_fallthru
      _
    %38 = sfence
    %v39 = vld [vmem:[%s0] sm:$0xff]
    %s40 = sld [smem:[#allocation2]]
    %v41 = vstv %s40
    %v42 = vmul.f32 %v39, %v41
    %s43 = sld [smem:[#allocation2 + $0x1]]
    %v44 = vstv %s43
    %v45 = vmul.f32 %v39, %v44
    %47 = vrot.lane.b32.xlu0 %v45, 127
    %v48 = vpop.permute.xlu0 %47
    %v50 = vadd.f32 %v42, %v48
    %s51 = sld [smem:[#allocation2 + $0x2]]
    %v52 = vstv %s51
    %v53 = vmul.f32 %v39, %v52
    %55 = vrot.lane.b32.xlu0 %v53, 126
    %v56 = vpop.permute.xlu0 %55
    %v58 = vadd.f32 %v50, %v56
    %s59 = sld [smem:[#allocation4]]
    %v60 = vstv %s59
    %v61 = vadd.f32 %v58, %v60
    %s62 = sld [smem:[#allocation2 + $0x3]]
    %v63 = vstv %s62
    %v64 = vmul.f32 %v39, %v63
    %s65 = sld [smem:[#allocation2 + $0x4]]
    %v66 = vstv %s65
    %v67 = vmul.f32 %v39, %v66
    %69 = vrot.lane.b32.xlu0 %v67, 127
    %v70 = vpop.permute.xlu0 %69
    %v72 = vadd.f32 %v64, %v70
    %s73 = sld [smem:[#allocation2 + $0x5]]
    %v74 = vstv %s73
    %v75 = vmul.f32 %v39, %v74
    %77 = vrot.lane.b32.xlu0 %v75, 126
    %v78 = vpop.permute.xlu0 %77
    %v80 = vadd.f32 %v72, %v78
    %s81 = sld [smem:[#allocation4 + $0x1]]
    %v82 = vstv %s81
    %v83 = vadd.f32 %v80, %v82
    %s84 = sld [smem:[#allocation2 + $0x6]]
    %v85 = vstv %s84
    %v86 = vmul.f32 %v39, %v85
    %s87 = sld [smem:[#allocation2 + $0x7]]
    %v88 = vstv %s87
    %v89 = vmul.f32 %v39, %v88
    %91 = vrot.lane.b32.xlu0 %v89, 127
    %v92 = vpop.permute.xlu0 %91
    %v94 = vadd.f32 %v86, %v92
    %s95 = sld [smem:[#allocation2 + $0x8]]
    %v96 = vstv %s95
    %v97 = vmul.f32 %v39, %v96
    %99 = vrot.lane.b32.xlu0 %v97, 126
    %v100 = vpop.permute.xlu0 %99
    %v102 = vadd.f32 %v94, %v100
    %s103 = sld [smem:[#allocation4 + $0x2]]
    %v104 = vstv %s103
    %v105 = vadd.f32 %v102, %v104
    %s106 = sld [smem:[#allocation2 + $0x9]]
    %v107 = vstv %s106
    %v108 = vmul.f32 %v61, %v107
    %s109 = sld [smem:[#allocation2 + $0xa]]
    %v110 = vstv %s109
    %v111 = vmul.f32 %v83, %v110
    %v112 = vadd.f32 %v108, %v111
    %s113 = sld [smem:[#allocation2 + $0xb]]
    %v114 = vstv %s113
    %v115 = vmul.f32 %v105, %v114
    %v116 = vadd.f32 %v112, %v115
    %s117 = sld [smem:[#allocation4 + $0x3]]
    %v118 = vstv %s117
    %v119 = vadd.f32 %v116, %v118
    %s120 = sld [smem:[#allocation2 + $0xc]]
    %v121 = vstv %s120
    %v122 = vmul.f32 %v61, %v121
    %s123 = sld [smem:[#allocation2 + $0xd]]
    %v124 = vstv %s123
    %v125 = vmul.f32 %v83, %v124
    %v126 = vadd.f32 %v122, %v125
    %s127 = sld [smem:[#allocation2 + $0xe]]
    %v128 = vstv %s127
    %v129 = vmul.f32 %v105, %v128
    %v130 = vadd.f32 %v126, %v129
    %s131 = sld [smem:[#allocation4 + $0x4]]
    %v132 = vstv %s131
    %v133 = vadd.f32 %v130, %v132
    %s134 = sld [smem:[#allocation2 + $0xf]]
    %v135 = vstv %s134
    %v136 = vmul.f32 %v61, %v135
    %s137 = sld [smem:[#allocation2 + $0x10]]
    %v138 = vstv %s137
    %v139 = vmul.f32 %v83, %v138
    %v140 = vadd.f32 %v136, %v139
    %s141 = sld [smem:[#allocation2 + $0x11]]
    %v142 = vstv %s141
    %v143 = vmul.f32 %v105, %v142
    %v144 = vadd.f32 %v140, %v143
    %s145 = sld [smem:[#allocation4 + $0x5]]
    %v146 = vstv %s145
    %v147 = vadd.f32 %v144, %v146
    %s148 = sld [smem:[#allocation2 + $0x12]]
    %v149 = vstv %s148
    %v150 = vmul.f32 %v119, %v149
    %s151 = sld [smem:[#allocation2 + $0x13]]
    %v152 = vstv %s151
    %v153 = vmul.f32 %v133, %v152
    %v154 = vadd.f32 %v150, %v153
    %s155 = sld [smem:[#allocation2 + $0x14]]
    %v156 = vstv %s155
    %v157 = vmul.f32 %v147, %v156
    %v158 = vadd.f32 %v154, %v157
    %s159 = sld [smem:[#allocation4 + $0x6]]
    %v160 = vstv %s159
    %v161 = vadd.f32 %v158, %v160
    %s162 = sld [smem:[#allocation2 + $0x15]]
    %v163 = vstv %s162
    %v164 = vmul.f32 %v119, %v163
    %s165 = sld [smem:[#allocation2 + $0x16]]
    %v166 = vstv %s165
    %v167 = vmul.f32 %v133, %v166
    %v168 = vadd.f32 %v164, %v167
    %s169 = sld [smem:[#allocation2 + $0x17]]
    %v170 = vstv %s169
    %v171 = vmul.f32 %v147, %v170
    %v172 = vadd.f32 %v168, %v171
    %s173 = sld [smem:[#allocation4 + $0x7]]
    %v174 = vstv %s173
    %v175 = vadd.f32 %v172, %v174
    %s176 = sld [smem:[#allocation2 + $0x18]]
    %v177 = vstv %s176
    %v178 = vmul.f32 %v119, %v177
    %s179 = sld [smem:[#allocation2 + $0x19]]
    %v180 = vstv %s179
    %v181 = vmul.f32 %v133, %v180
    %v182 = vadd.f32 %v178, %v181
    %s183 = sld [smem:[#allocation2 + $0x1a]]
    %v184 = vstv %s183
    %v185 = vmul.f32 %v147, %v184
    %v186 = vadd.f32 %v182, %v185
    %s187 = sld [smem:[#allocation4 + $0x8]]
    %v188 = vstv %s187
    %v189 = vadd.f32 %v186, %v188
    %191 = vrot.lane.b32.xlu0 %v175, 1
    %v192 = vpop.permute.xlu0 %191
    %195 = vrot.lane.b32.xlu0 %v189, 2
    %v196 = vpop.permute.xlu0 %195
    %vm198 = vcmask 7168
    %v199 = vsel %vm198, %v161, %v192
    %vm200 = vcmask 15360
    %v201 = vsel %vm200, %v199, %v196
    %vm202 = vcmask 23552
    %203 = vst.msk [vmem:[%s3] sm:$0xff] %vm202, %v201
    // Predicated region
    $region22: #{tpu_custom_call.1} parent=1 // pred_check
      _
    $region23: #{tpu_custom_call.1} parent=1 // pred_check_branch
      %205 = sbr.rel (0) target = $region25
    $region24: #{tpu_custom_call.1} parent=1 // pred_region
      _
    $region25: #{tpu_custom_call.1} parent=1 // pred_fallthru
      _
    // Predicated region
    $region26: #{tpu_custom_call.1} parent=1 // pred_check
      _
    $region27: #{tpu_custom_call.1} parent=1 // pred_check_branch
      %207 = sbr.rel (0) target = $region29
    $region28: #{tpu_custom_call.1} parent=1 // pred_region
      _
    $region29: #{tpu_custom_call.1} parent=1 // pred_fallthru
      _
    %208 = vsyncpa [#allocation3], 1
    %209 = vsyncpa [#allocation5], 1

</llo_original>
